<compile_context>
chip_gen: v7x
topology: tpu7x:2x2x1
jax: 0.10.0
libtpu: 0.0.40
codegen_flags: <defaults>
</compile_context>

<pallas_src>
import math

import jax
import jax.numpy as jnp
from jax.experimental import pallas as pl
from jax.experimental.pallas import tpu as pltpu

_INV_SQRT2 = 0.7071067811865475


def _gelu_exact_f32(x):
    # PyTorch nn.GELU() default: exact erf formulation, evaluated in f32.
    return 0.5 * x * (1.0 + jax.lax.erf(x * _INV_SQRT2))


def _round_up(x, m):
    return ((x + m - 1) // m) * m


def _make_mlp_kernel(num_layers, approximate_gelu=False):
    def kernel(x_ref, *refs):
        o_ref = refs[-1]
        h = x_ref[...]
        for i in range(num_layers):
            w = refs[2 * i][...]
            b = refs[2 * i + 1][...]
            # Matmul in the storage dtype (bf16 hits MXU peak rate); accumulate in f32.
            acc = jnp.dot(h, w, preferred_element_type=jnp.float32)
            acc = acc + b.astype(jnp.float32)
            if approximate_gelu:
                # Optional tanh approximation (EUP-friendly on v6e/v7x); changes
                # numerics vs the PyTorch exact GELU, so default is off.
                acc = jax.nn.gelu(acc, approximate=True)
            else:
                acc = _gelu_exact_f32(acc)
            # Dropout(p=0.0) is the identity.
            # TODO(synk): dropout with p>0 (training mode) is not implemented; the
            # module default p=0.0 makes it a no-op in this forward pass.
            h = acc.astype(w.dtype) if i + 1 < num_layers else acc
        o_ref[...] = h.astype(o_ref.dtype)

    return kernel


def _pick_block_b(B, F_pad, itemsize, num_layers, vmem_budget=40 * 1024 * 1024):
    """Largest batch tile that fits the VMEM budget, with >= 2 grid steps if possible."""
    align = 16 if itemsize == 2 else 8  # sublane packing (bf16 packs 16 rows per vreg)
    # Resident weights/biases; conservatively counted double-buffered (pipeline
    # allocates 2 buffers even though constant index_maps mean one DMA total).
    w_resident = 2 * num_layers * (F_pad * F_pad + F_pad) * itemsize
    # Per batch-row VMEM: double-buffered x tile + double-buffered out tile + f32 hidden.
    per_row = 4 * F_pad * itemsize + 4 * F_pad
    avail = max(vmem_budget - w_resident, align * per_row)
    bb = max(align, min(avail // per_row, 1024))
    bb = (bb // align) * align
    if B > align:
        # Prefer at least two grid steps: overlaps DMA with compute and lets the
        # "parallel" grid axis shard across both TensorCores on megacore parts (v7x).
        bb = min(bb, _round_up(_round_up(B, align) // 2, align))
    else:
        bb = align
    return int(bb)


def mlp_forward(x, params, *, block_b=None, approximate_gelu=False):
    """params: list of (W, b) with W [F, F] in [in, out] layout and b [1, F]."""
    B, F = x.shape
    num_layers = len(params)
    for w, b in params:
        assert w.shape == (F, F), w.shape
        assert b.shape == (1, F), b.shape

    itemsize = jnp.dtype(x.dtype).itemsize
    F_pad = _round_up(F, 128)  # lane-dense loads/stores
    if block_b is None:
        block_b = _pick_block_b(B, F_pad, itemsize, num_layers)
    else:
        block_b = _round_up(block_b, 16 if itemsize == 2 else 8)
    B_pad = _round_up(B, block_b)
    grid = (B_pad // block_b,)

    xp = x if (B_pad, F_pad) == (B, F) else jnp.pad(x, ((0, B_pad - B), (0, F_pad - F)))
    flat_args = [xp]
    in_specs = [pl.BlockSpec((block_b, F_pad), lambda i: (i, 0))]
    for w, b in params:
        if F_pad != F:
            # Zero padding keeps pad lanes exactly GELU(0) == 0 through every layer.
            w = jnp.pad(w, ((0, F_pad - F), (0, F_pad - F)))
            b = jnp.pad(b, ((0, 0), (0, F_pad - F)))
        flat_args += [w, b]
        in_specs += [
            pl.BlockSpec((F_pad, F_pad), lambda i: (0, 0)),  # weight (resident, one DMA)
            pl.BlockSpec((1, F_pad), lambda i: (0, 0)),      # bias   (resident, one DMA)
        ]

    flops = 2 * B_pad * F_pad * F_pad * num_layers
    transcendentals = B_pad * F_pad * num_layers  # one erf per activation
    bytes_accessed = (
        (B_pad * F_pad) * 2 * itemsize                      # x in + y out
        + num_layers * (F_pad * F_pad + F_pad) * itemsize   # weights + biases
    )

    out = pl.pallas_call(
        _make_mlp_kernel(num_layers, approximate_gelu=approximate_gelu),
        out_shape=jax.ShapeDtypeStruct((B_pad, F_pad), x.dtype),
        grid=grid,
        in_specs=in_specs,
        out_specs=pl.BlockSpec((block_b, F_pad), lambda i: (i, 0)),
        compiler_params=pltpu.CompilerParams(
            dimension_semantics=("parallel",),
            # Raise the scoped VMEM limit above the 32 MiB default (needed for big
            # batch tiles on v6e) while keeping headroom under v7x's 64 MiB physical.
            vmem_limit_bytes=48 * 1024 * 1024,
        ),
        cost_estimate=pl.CostEstimate(
            flops=flops,
            transcendentals=transcendentals,
            bytes_accessed=bytes_accessed,
        ),
    )(*flat_args)

    if (B_pad, F_pad) != (B, F):
        out = out[:B, :F]
    return out


def init_params(key, feature_size, layers=2, dtype=jnp.bfloat16):
    """nn.Linear-style uniform(-1/sqrt(fan_in), +1/sqrt(fan_in)) init, [in, out] layout."""
    lim = 1.0 / math.sqrt(feature_size)
    keys = jax.random.split(key, 2 * layers)
    params = []
    for i in range(layers):
        w = jax.random.uniform(
            keys[2 * i], (feature_size, feature_size), jnp.float32, -lim, lim)
        b = jax.random.uniform(
            keys[2 * i + 1], (1, feature_size), jnp.float32, -lim, lim)
        params.append((w.astype(dtype), b.astype(dtype)))
    return params


def mlp_reference(x, params):
    """Pure-JAX f32 reference of the PyTorch module (exact GELU, dropout p=0)."""
    h = x.astype(jnp.float32)
    for w, b in params:
        h = _gelu_exact_f32(h @ w.astype(jnp.float32) + b.astype(jnp.float32))
    return h


if __name__ == "__main__":
    # Small shapes consistent with the module: batch=256, feature_size=128, layers=2.
    # feature_size is 128-lane aligned; the batch splits into two 128-row grid steps.
    B, F, L = 256, 128, 2
    key = jax.random.PRNGKey(0)
    kx, kp = jax.random.split(key)
    x = jax.random.normal(kx, (B, F), jnp.float32).astype(jnp.bfloat16)
    params = init_params(kp, F, layers=L, dtype=jnp.bfloat16)

    out = jax.block_until_ready(mlp_forward(x, params))
    assert out.shape == (B, F) and out.dtype == x.dtype

    ref = mlp_reference(x, params)
    max_err = float(jnp.max(jnp.abs(out.astype(jnp.float32) - ref)))
    assert max_err < 2.5e-2, f"mismatch vs reference: max abs err = {max_err}"

    print("KERNEL_OK")
</pallas_src>

<mosaic_0001>
module attributes {stable_mosaic.version = 11 : i64} {
  func.func @kernel(%arg0: i32, %arg1: memref<128x128xbf16, #tpu.memory_space<vmem>>, %arg2: memref<128x128xbf16, #tpu.memory_space<vmem>>, %arg3: memref<1x128xbf16, #tpu.memory_space<vmem>>, %arg4: memref<128x128xbf16, #tpu.memory_space<vmem>>, %arg5: memref<1x128xbf16, #tpu.memory_space<vmem>>, %arg6: memref<128x128xbf16, #tpu.memory_space<vmem>>) attributes {dimension_semantics = [#tpu.dimension_semantics<parallel>], iteration_bounds = array<i64: 2>, scalar_prefetch = 0 : i64, scratch_operands = 0 : i64, tpu.core_type = #tpu.core_type<tc>, window_params = [{transform_indices = @transform_0, window_bounds = array<i64: 128, 128>}, {pipeline_mode = #tpu.pipeline_mode<synchronous>, transform_indices = @transform_1, window_bounds = array<i64: 128, 128>}, {pipeline_mode = #tpu.pipeline_mode<synchronous>, transform_indices = @transform_2, window_bounds = array<i64: 1, 128>}, {pipeline_mode = #tpu.pipeline_mode<synchronous>, transform_indices = @transform_3, window_bounds = array<i64: 128, 128>}, {pipeline_mode = #tpu.pipeline_mode<synchronous>, transform_indices = @transform_4, window_bounds = array<i64: 1, 128>}, {transform_indices = @transform_5, window_bounds = array<i64: 128, 128>}]} {
    %c0 = arith.constant 0 : index
    %c0_0 = arith.constant 0 : index
    %0 = vector.load %arg1[%c0, %c0_0] : memref<128x128xbf16, #tpu.memory_space<vmem>>, vector<128x128xbf16>
    %c0_1 = arith.constant 0 : index
    %c0_2 = arith.constant 0 : index
    %1 = vector.load %arg2[%c0_1, %c0_2] : memref<128x128xbf16, #tpu.memory_space<vmem>>, vector<128x128xbf16>
    %c0_3 = arith.constant 0 : index
    %c0_4 = arith.constant 0 : index
    %2 = vector.load %arg3[%c0_3, %c0_4] : memref<1x128xbf16, #tpu.memory_space<vmem>>, vector<1x128xbf16>
    %cst = arith.constant dense<0.000000e+00> : vector<128x128xf32>
    %3 = tpu.matmul %0, %1, %cst {dimension_numbers = #tpu.dot_dimension_numbers<[1], [0], [0], [1], [0, 0, 1, 1], [], []>} : vector<128x128xbf16>, vector<128x128xbf16>, vector<128x128xf32> -> vector<128x128xf32>
    %4 = arith.extf %2 : vector<1x128xbf16> to vector<1x128xf32>
    %5 = vector.broadcast %4 : vector<1x128xf32> to vector<128x128xf32>
    %6 = arith.addf %3, %5 : vector<128x128xf32>
    %cst_5 = arith.constant 5.000000e-01 : f32
    %7 = vector.broadcast %cst_5 : f32 to vector<128x128xf32>
    %8 = arith.mulf %7, %6 : vector<128x128xf32>
    %cst_6 = arith.constant 0.707106769 : f32
    %9 = vector.broadcast %cst_6 : f32 to vector<128x128xf32>
    %10 = arith.mulf %6, %9 : vector<128x128xf32>
    %11 = math.erf %10 : vector<128x128xf32>
    %cst_7 = arith.constant 1.000000e+00 : f32
    %12 = vector.broadcast %cst_7 : f32 to vector<128x128xf32>
    %13 = arith.addf %12, %11 : vector<128x128xf32>
    %14 = arith.mulf %8, %13 : vector<128x128xf32>
    %15 = arith.truncf %14 : vector<128x128xf32> to vector<128x128xbf16>
    %c0_8 = arith.constant 0 : index
    %c0_9 = arith.constant 0 : index
    %16 = vector.load %arg4[%c0_8, %c0_9] : memref<128x128xbf16, #tpu.memory_space<vmem>>, vector<128x128xbf16>
    %c0_10 = arith.constant 0 : index
    %c0_11 = arith.constant 0 : index
    %17 = vector.load %arg5[%c0_10, %c0_11] : memref<1x128xbf16, #tpu.memory_space<vmem>>, vector<1x128xbf16>
    %cst_12 = arith.constant dense<0.000000e+00> : vector<128x128xf32>
    %18 = tpu.matmul %15, %16, %cst_12 {dimension_numbers = #tpu.dot_dimension_numbers<[1], [0], [0], [1], [0, 0, 1, 1], [], []>} : vector<128x128xbf16>, vector<128x128xbf16>, vector<128x128xf32> -> vector<128x128xf32>
    %19 = arith.extf %17 : vector<1x128xbf16> to vector<1x128xf32>
    %20 = vector.broadcast %19 : vector<1x128xf32> to vector<128x128xf32>
    %21 = arith.addf %18, %20 : vector<128x128xf32>
    %cst_13 = arith.constant 5.000000e-01 : f32
    %22 = vector.broadcast %cst_13 : f32 to vector<128x128xf32>
    %23 = arith.mulf %22, %21 : vector<128x128xf32>
    %cst_14 = arith.constant 0.707106769 : f32
    %24 = vector.broadcast %cst_14 : f32 to vector<128x128xf32>
    %25 = arith.mulf %21, %24 : vector<128x128xf32>
    %26 = math.erf %25 : vector<128x128xf32>
    %cst_15 = arith.constant 1.000000e+00 : f32
    %27 = vector.broadcast %cst_15 : f32 to vector<128x128xf32>
    %28 = arith.addf %27, %26 : vector<128x128xf32>
    %29 = arith.mulf %23, %28 : vector<128x128xf32>
    %30 = arith.truncf %29 : vector<128x128xf32> to vector<128x128xbf16>
    %c0_16 = arith.constant 0 : index
    %c0_17 = arith.constant 0 : index
    %31 = vector.load %arg6[%c0_16, %c0_17] : memref<128x128xbf16, #tpu.memory_space<vmem>>, vector<128x128xbf16>
    tpu.vector_store %arg6[%c0_16, %c0_17], %30 {strides = array<i32>} : memref<128x128xbf16, #tpu.memory_space<vmem>>, vector<128x128xbf16>,
    return
  }
  func.func @transform_0(%arg0: i32) -> (i32, i32) {
    %c0_i32 = arith.constant 0 : i32
    %c0_i32_0 = arith.constant 0 : i32
    return %arg0, %c0_i32 : i32, i32
  }
  func.func @transform_1(%arg0: i32) -> (i32, i32) {
    %c0_i32 = arith.constant 0 : i32
    %c0_i32_0 = arith.constant 0 : i32
    %c0_i32_1 = arith.constant 0 : i32
    return %c0_i32, %c0_i32_0 : i32, i32
  }
  func.func @transform_2(%arg0: i32) -> (i32, i32) {
    %c0_i32 = arith.constant 0 : i32
    %c0_i32_0 = arith.constant 0 : i32
    %c0_i32_1 = arith.constant 0 : i32
    return %c0_i32, %c0_i32_0 : i32, i32
  }
  func.func @transform_3(%arg0: i32) -> (i32, i32) {
    %c0_i32 = arith.constant 0 : i32
    %c0_i32_0 = arith.constant 0 : i32
    %c0_i32_1 = arith.constant 0 : i32
    return %c0_i32, %c0_i32_0 : i32, i32
  }
  func.func @transform_4(%arg0: i32) -> (i32, i32) {
    %c0_i32 = arith.constant 0 : i32
    %c0_i32_0 = arith.constant 0 : i32
    %c0_i32_1 = arith.constant 0 : i32
    return %c0_i32, %c0_i32_0 : i32, i32
  }
  func.func @transform_5(%arg0: i32) -> (i32, i32) {
    %c0_i32 = arith.constant 0 : i32
    %c0_i32_0 = arith.constant 0 : i32
    return %arg0, %c0_i32 : i32, i32
  }
}

</mosaic_0001>

<llo_original>
// kernel: tpu_custom_call.1
$region0: #{tpu_custom_call.1}
  #allocation0 [shape = 'u32[]', space=smem, size = 0x4, offset = 0x4, fixed_abs, tag = 'smem constant byte address 0x4 - core index']
  #allocation1 [shape = 'u32[144,128]{1,0:T(1,128)}', space=vmem, size = 0x12000, scoped, tag = 'internal scratch']
  %s0 = inlined_call_operand.hbm [shape: bf16[256,128], index: 0, kind: input, shape index: {}]
  %s1 = inlined_call_operand.hbm [shape: bf16[128,128], index: 1, kind: input, shape index: {}]
  %s2 = inlined_call_operand.vmem [shape: bf16[1,128], index: 2, kind: input, shape index: {}]
  %s3 = inlined_call_operand.hbm [shape: bf16[128,128], index: 3, kind: input, shape index: {}]
  %s4 = inlined_call_operand.vmem [shape: bf16[1,128], index: 4, kind: input, shape index: {}]
  %s5 = inlined_call_operand.hbm [shape: bf16[256,128], index: 5, kind: output, shape index: {}]
  %s6 = sld [smem:[#allocation0]]
  $region65: #{tpu_custom_call.1} parent=0
    _
  %s8 = ssub.s32 1, %s6
  %s9 = scalar_select 0, %s8, %s6
  $region1: #{tpu_custom_call.1} parent=0
    #allocation2 [shape = 'u8[65536]{0}', space=vmem, size = 0x10000, scoped, tag = 'input window, operand 0']
    #allocation3 [shape = 's32[2]{0}', space=sflag, size = 0x8, scoped, tag = 'scoped memory for tpu_custom_call.1']
    #allocation4 [shape = 's32[2]{0}', space=sflag, size = 0x8, scoped, tag = 'scoped memory for tpu_custom_call.1']
    #allocation5 [shape = 'u8[32768]{0}', space=vmem, size = 0x8000, scoped, tag = 'input window, operand 1, single buffered']
    #allocation6 [shape = 's32[1]{0}', space=sflag, size = 0x4, scoped, tag = 'scoped memory for tpu_custom_call.1']
    #allocation7 [shape = 'u8[32768]{0}', space=vmem, size = 0x8000, scoped, tag = 'input window, operand 3, single buffered']
    #allocation8 [shape = 'u8[65536]{0}', space=vmem, size = 0x10000, scoped, tag = 'output window, operand 0']
    %10 = vsyncpa [#allocation3], 0
    %s11 = scalar_lea.sflag [#allocation3], 1
    %12 = vsyncpa %s11, 0
    %13 = vsyncpa [#allocation6], 0
    %14 = vsyncpa [#allocation4], 0
    %s15 = scalar_lea.sflag [#allocation4], 1
    %16 = vsyncpa %s15, 0
    loop: start=0, step=1, limit=4
    $region2: #{tpu_custom_call.1} parent=1 // loop_pre_header
      _
    $region3: #{tpu_custom_call.1} parent=1 // loop_header
      %s18 = sphi 0, %s22
      %p19 = scmp.ge.s32.totalorder %s18, 4
      %s28 = sphi 0, %s30
      %s31 = sphi 0, %s28
      %s32 = sphi 0, %s31
      %s48 = sphi 0, %s32
      %s52 = sphi 0, %s52
      %s54 = sphi 0, %s52
      %s55 = sphi 0, %s54
      %s69 = sphi 0, %s55
      %s73 = sphi 0, %s73
      %s75 = sphi 0, %s73
      %s76 = sphi 0, %s75
      %s90 = sphi 0, %s76
      %s94 = sphi 0, %s94
      %s96 = sphi 0, %s94
      %s97 = sphi 0, %s96
      %s111 = sphi 0, %s97
      %s115 = sphi 0, %s115
      %s117 = sphi 0, %s115
      %s118 = sphi 0, %s117
      %s132 = sphi 0, %s118
      %s138 = sphi 0, %s140
      %s141 = sphi 0, %s138
      %s142 = sphi 0, %s141
      %s158 = sphi 0, %s142
    $region4: #{tpu_custom_call.1} parent=1 // loop_header_branch
      %21 = sbr.rel (%p19) target = $region8
    $region5: #{tpu_custom_call.1} parent=1 // loop_body
      %s23 = ssub.s32 %s18, 1
      %s24 = ssub.s32 %s18, 2
      %s25 = sadd.s32 %s18, 1
      %s26 = ssub.s32 %s18, %s25
      %p27 = scmp.eq.s32.totalorder %s26, 0
      %s29 = sadd.s32 %s28, 1
      %s30 = scalar_select %p27, %s28, %s29
      %p33 = pneg %p27
      %p34 = scmp.eq.s32.totalorder %s18, 1
      %p35 = por %p33, %p34
      %p36 = scmp.ne.s32.totalorder %s28, %s31
      %p37 = scmp.eq.s32.totalorder %s18, 0
      %p38 = por %p36, %p37
      %p39 = scmp.ne.s32.totalorder %s28, %s31
      %p40 = scmp.eq.s32.totalorder %s23, 1
      %p41 = por %p39, %p40
      %p42 = scmp.ne.s32.totalorder %s31, %s32
      %p43 = scmp.eq.s32.totalorder %s23, 0
      %p44 = por %p42, %p43
      %p45 = scmp.ne.s32.totalorder %s31, %s32
      %p46 = scmp.eq.s32.totalorder %s24, 1
      %p47 = por %p45, %p46
      %p49 = scmp.ne.s32.totalorder %s32, %s48
      %p50 = scmp.eq.s32.totalorder %s24, 0
      %p51 = por %p49, %p50
      %s53 = sadd.s32 %s52, 1
      %p56 = scmp.eq.s32.totalorder %s18, 1
      %p57 = scmp.ne.s32.totalorder %s52, %s54
      %p58 = scmp.eq.s32.totalorder %s18, 0
      %p59 = por %p57, %p58
      %p60 = scmp.ne.s32.totalorder %s52, %s54
      %p61 = scmp.eq.s32.totalorder %s23, 1
      %p62 = por %p60, %p61
      %p63 = scmp.ne.s32.totalorder %s54, %s55
      %p64 = scmp.eq.s32.totalorder %s23, 0
      %p65 = por %p63, %p64
      %p66 = scmp.ne.s32.totalorder %s54, %s55
      %p67 = scmp.eq.s32.totalorder %s24, 1
      %p68 = por %p66, %p67
      %p70 = scmp.ne.s32.totalorder %s55, %s69
      %p71 = scmp.eq.s32.totalorder %s24, 0
      %p72 = por %p70, %p71
      %s74 = sadd.s32 %s73, 1
      %p77 = scmp.eq.s32.totalorder %s18, 1
      %p78 = scmp.ne.s32.totalorder %s73, %s75
      %p79 = scmp.eq.s32.totalorder %s18, 0
      %p80 = por %p78, %p79
      %p81 = scmp.ne.s32.totalorder %s73, %s75
      %p82 = scmp.eq.s32.totalorder %s23, 1
      %p83 = por %p81, %p82
      %p84 = scmp.ne.s32.totalorder %s75, %s76
      %p85 = scmp.eq.s32.totalorder %s23, 0
      %p86 = por %p84, %p85
      %p87 = scmp.ne.s32.totalorder %s75, %s76
      %p88 = scmp.eq.s32.totalorder %s24, 1
      %p89 = por %p87, %p88
      %p91 = scmp.ne.s32.totalorder %s76, %s90
      %p92 = scmp.eq.s32.totalorder %s24, 0
      %p93 = por %p91, %p92
      %s95 = sadd.s32 %s94, 1
      %p98 = scmp.eq.s32.totalorder %s18, 1
      %p99 = scmp.ne.s32.totalorder %s94, %s96
      %p100 = scmp.eq.s32.totalorder %s18, 0
      %p101 = por %p99, %p100
      %p102 = scmp.ne.s32.totalorder %s94, %s96
      %p103 = scmp.eq.s32.totalorder %s23, 1
      %p104 = por %p102, %p103
      %p105 = scmp.ne.s32.totalorder %s96, %s97
      %p106 = scmp.eq.s32.totalorder %s23, 0
      %p107 = por %p105, %p106
      %p108 = scmp.ne.s32.totalorder %s96, %s97
      %p109 = scmp.eq.s32.totalorder %s24, 1
      %p110 = por %p108, %p109
      %p112 = scmp.ne.s32.totalorder %s97, %s111
      %p113 = scmp.eq.s32.totalorder %s24, 0
      %p114 = por %p112, %p113
      %s116 = sadd.s32 %s115, 1
      %p119 = scmp.eq.s32.totalorder %s18, 1
      %p120 = scmp.ne.s32.totalorder %s115, %s117
      %p121 = scmp.eq.s32.totalorder %s18, 0
      %p122 = por %p120, %p121
      %p123 = scmp.ne.s32.totalorder %s115, %s117
      %p124 = scmp.eq.s32.totalorder %s23, 1
      %p125 = por %p123, %p124
      %p126 = scmp.ne.s32.totalorder %s117, %s118
      %p127 = scmp.eq.s32.totalorder %s23, 0
      %p128 = por %p126, %p127
      %p129 = scmp.ne.s32.totalorder %s117, %s118
      %p130 = scmp.eq.s32.totalorder %s24, 1
      %p131 = por %p129, %p130
      %p133 = scmp.ne.s32.totalorder %s118, %s132
      %p134 = scmp.eq.s32.totalorder %s24, 0
      %p135 = por %p133, %p134
      %s136 = ssub.s32 %s18, %s25
      %p137 = scmp.eq.s32.totalorder %s136, 0
      %s139 = sadd.s32 %s138, 1
      %s140 = scalar_select %p137, %s138, %s139
      %p143 = pneg %p137
      %p144 = scmp.eq.s32.totalorder %s18, 1
      %p145 = por %p143, %p144
      %p146 = scmp.ne.s32.totalorder %s138, %s141
      %p147 = scmp.eq.s32.totalorder %s18, 0
      %p148 = por %p146, %p147
      %p149 = scmp.ne.s32.totalorder %s138, %s141
      %p150 = scmp.eq.s32.totalorder %s23, 1
      %p151 = por %p149, %p150
      %p152 = scmp.ne.s32.totalorder %s141, %s142
      %p153 = scmp.eq.s32.totalorder %s23, 0
      %p154 = por %p152, %p153
      %p155 = scmp.ne.s32.totalorder %s141, %s142
      %p156 = scmp.eq.s32.totalorder %s24, 1
      %p157 = por %p155, %p156
      %p159 = scmp.ne.s32.totalorder %s142, %s158
      %p160 = scmp.eq.s32.totalorder %s24, 0
      %p161 = por %p159, %p160
      %p162 = scmp.le.s32.totalorder 1, %s18
      %p163 = scmp.lt.s32.totalorder %s18, 3
      %p164 = pnand %p162, %p163
      %p165 = pneg %p164
      // Predicated region
      $region9: #{tpu_custom_call.1} parent=5 // pred_check
        _
      $region10: #{tpu_custom_call.1} parent=5 // pred_check_branch
        %167 = sbr.rel (%p164) target = $region12
      $region11: #{tpu_custom_call.1} parent=5 // pred_region
        %s168 = ssub.s32 %s18, 1
        // Predicated region
        $region13: #{tpu_custom_call.1} parent=11 // pred_check
          %p169 = pneg %p65
        $region14: #{tpu_custom_call.1} parent=11 // pred_check_branch
          %171 = sbr.rel (%p169) target = $region16
        $region15: #{tpu_custom_call.1} parent=11 // pred_region
          %s173 = ssub.s32 1024, 1024
          %174 = vsyncadd [#allocation6], %s173
          %s175 = sshll.u32 [#allocation5], 4
          %s176 = int_to_ptr.vmem [resolvable:$true] %s175
          %181 = dma.hbm_to_vmem [thread:$0]  %s1, 1024, %s176, [#allocation6], 64, 64, 4
        $region16: #{tpu_custom_call.1} parent=11 // pred_fallthru
          _
        // Predicated region
        $region17: #{tpu_custom_call.1} parent=11 // pred_check
          %p182 = pneg %p86
        $region18: #{tpu_custom_call.1} parent=11 // pred_check_branch
          %184 = sbr.rel (%p182) target = $region20
        $region19: #{tpu_custom_call.1} parent=11 // pred_region
          _
        $region20: #{tpu_custom_call.1} parent=11 // pred_fallthru
          _
        // Predicated region
        $region21: #{tpu_custom_call.1} parent=11 // pred_check
          %p185 = pneg %p107
        $region22: #{tpu_custom_call.1} parent=11 // pred_check_branch
          %187 = sbr.rel (%p185) target = $region24
        $region23: #{tpu_custom_call.1} parent=11 // pred_region
          %s189 = ssub.s32 1024, 1024
          %190 = vsyncadd [#allocation6], %s189
          %s191 = sshll.u32 [#allocation7], 4
          %s192 = int_to_ptr.vmem [resolvable:$true] %s191
          %197 = dma.hbm_to_vmem [thread:$0]  %s3, 1024, %s192, [#allocation6], 64, 64, 4
        $region24: #{tpu_custom_call.1} parent=11 // pred_fallthru
          _
        // Predicated region
        $region25: #{tpu_custom_call.1} parent=11 // pred_check
          %p198 = pneg %p128
        $region26: #{tpu_custom_call.1} parent=11 // pred_check_branch
          %200 = sbr.rel (%p198) target = $region28
        $region27: #{tpu_custom_call.1} parent=11 // pred_region
          _
        $region28: #{tpu_custom_call.1} parent=11 // pred_fallthru
          _
      $region12: #{tpu_custom_call.1} parent=5 // pred_fallthru
        _
      %p201 = scmp.lt.s32.totalorder %s18, 2
      // Predicated region
      $region29: #{tpu_custom_call.1} parent=5 // pred_check
        %p202 = pneg %p201
      $region30: #{tpu_custom_call.1} parent=5 // pred_check_branch
        %204 = sbr.rel (%p202) target = $region32
      $region31: #{tpu_custom_call.1} parent=5 // pred_region
        // Predicated region
        $region33: #{tpu_custom_call.1} parent=31 // pred_check
          %p205 = pneg %p38
        $region34: #{tpu_custom_call.1} parent=31 // pred_check_branch
          %207 = sbr.rel (%p205) target = $region36
        $region35: #{tpu_custom_call.1} parent=31 // pred_region
          %s208 = sand.u32 %s28, 1
          %s209 = scalar_lea.sflag [#allocation3], %s208
          %s210 = sand.u32 %s28, 1
          %s211 = smul.addr %s210, 64
          %s212 = scalar_lea.vmem [#allocation2], %s211
          %s213 = smul.u32 16, %s18
          %s215 = ssub.s32 1024, 1024
          %216 = vsyncadd %s209, %s215
          %s217 = smul.addr %s213, 64
          %s218 = scalar_lea.hbm %s0, %s217
          %s219 = sshll.u32 %s212, 4
          %s220 = int_to_ptr.vmem [resolvable:$true] %s219
          %225 = dma.hbm_to_vmem [thread:$0]  %s218, 1024, %s220, %s209, 64, 64, 4
        $region36: #{tpu_custom_call.1} parent=31 // pred_fallthru
          _
      $region32: #{tpu_custom_call.1} parent=5 // pred_fallthru
        _
      %p226 = scmp.le.s32.totalorder 1, %s18
      %p227 = scmp.lt.s32.totalorder %s18, 3
      %p228 = pnand %p226, %p227
      %p229 = pneg %p228
      // Predicated region
      $region37: #{tpu_custom_call.1} parent=5 // pred_check
        _
      $region38: #{tpu_custom_call.1} parent=5 // pred_check_branch
        %231 = sbr.rel (%p228) target = $region40
      $region39: #{tpu_custom_call.1} parent=5 // pred_region
        %s232 = ssub.s32 %s18, 1
        %s233 = sand.u32 %s31, 1
        %s234 = scalar_lea.sflag [#allocation3], %s233
        %s235 = sand.u32 %s31, 1
        %s236 = smul.addr %s235, 64
        %s237 = scalar_lea.vmem [#allocation2], %s236
        // Predicated region
        $region41: #{tpu_custom_call.1} parent=39 // pred_check
          %p238 = pneg %p44
        $region42: #{tpu_custom_call.1} parent=39 // pred_check_branch
          %240 = sbr.rel (%p238) target = $region44
        $region43: #{tpu_custom_call.1} parent=39 // pred_region
          %241 = dma.done %s234, 1024
        $region44: #{tpu_custom_call.1} parent=39 // pred_fallthru
          _
        // Predicated region
        $region45: #{tpu_custom_call.1} parent=39 // pred_check
          %p242 = pneg %p65
        $region46: #{tpu_custom_call.1} parent=39 // pred_check_branch
          %244 = sbr.rel (%p242) target = $region48
        $region47: #{tpu_custom_call.1} parent=39 // pred_region
          %245 = dma.done [#allocation6], 1024
        $region48: #{tpu_custom_call.1} parent=39 // pred_fallthru
          _
        // Predicated region
        $region49: #{tpu_custom_call.1} parent=39 // pred_check
          %p246 = pneg %p107
        $region50: #{tpu_custom_call.1} parent=39 // pred_check_branch
          %248 = sbr.rel (%p246) target = $region52
        $region51: #{tpu_custom_call.1} parent=39 // pred_region
          %249 = dma.done [#allocation6], 1024
        $region52: #{tpu_custom_call.1} parent=39 // pred_fallthru
          _
        %s250 = sand.u32 %s31, 1
        %s251 = scalar_lea.sflag [#allocation3], %s250
        %s252 = sand.u32 %s31, 1
        %s253 = smul.addr %s252, 64
        %s254 = scalar_lea.vmem [#allocation2], %s253
        %p255 = pneg %p44
        %p256 = pneg %p41
        %p257 = pneg %p65
        %p258 = pneg %p62
        %p259 = pneg %p86
        %p260 = pneg %p83
        %p261 = pneg %p107
        %p262 = pneg %p104
        %p263 = pneg %p128
        %p264 = pneg %p125
        %p265 = pneg %p154
        %p266 = pneg %p151
        %s267 = sand.u32 %s141, 1
        %s268 = scalar_lea.sflag [#allocation4], %s267
        %s269 = sand.u32 %s141, 1
        %s270 = smul.addr %s269, 64
        %s271 = scalar_lea.vmem [#allocation8], %s270
        %s272 = smul.u32 16, %s23
        %s273 = smul.u32 16, %s23
        %v275 = vld [vmem:[%s237] sm:$0xf]
        %v276 = vld [vmem:[%s237 + $0x4] sm:$0xf]
        %v277 = vld [vmem:[%s237 + $0x8] sm:$0xf]
        %v278 = vld [vmem:[%s237 + $0xc] sm:$0xf]
        %v279 = vld [vmem:[%s237 + $0x10] sm:$0xf]
        %v280 = vld [vmem:[%s237 + $0x14] sm:$0xf]
        %v281 = vld [vmem:[%s237 + $0x18] sm:$0xf]
        %v282 = vld [vmem:[%s237 + $0x1c] sm:$0xf]
        %v283 = vld [vmem:[%s237 + $0x20] sm:$0xf]
        %v284 = vld [vmem:[%s237 + $0x24] sm:$0xf]
        %v285 = vld [vmem:[%s237 + $0x28] sm:$0xf]
        %v286 = vld [vmem:[%s237 + $0x2c] sm:$0xf]
        %v287 = vld [vmem:[%s237 + $0x30] sm:$0xf]
        %v288 = vld [vmem:[%s237 + $0x34] sm:$0xf]
        %v289 = vld [vmem:[%s237 + $0x38] sm:$0xf]
        %v290 = vld [vmem:[%s237 + $0x3c] sm:$0xf]
        %v291 = vld [vmem:[#allocation5] sm:$0xf]
        %v292 = vld [vmem:[#allocation5 + $0x4] sm:$0xf]
        %v293 = vld [vmem:[#allocation5 + $0x8] sm:$0xf]
        %v294 = vld [vmem:[#allocation5 + $0xc] sm:$0xf]
        %v295 = vld [vmem:[#allocation5 + $0x10] sm:$0xf]
        %v296 = vld [vmem:[#allocation5 + $0x14] sm:$0xf]
        %v297 = vld [vmem:[#allocation5 + $0x18] sm:$0xf]
        %v298 = vld [vmem:[#allocation5 + $0x1c] sm:$0xf]
        %v299 = vld [vmem:[#allocation5 + $0x20] sm:$0xf]
        %v300 = vld [vmem:[#allocation5 + $0x24] sm:$0xf]
        %v301 = vld [vmem:[#allocation5 + $0x28] sm:$0xf]
        %v302 = vld [vmem:[#allocation5 + $0x2c] sm:$0xf]
        %v303 = vld [vmem:[#allocation5 + $0x30] sm:$0xf]
        %v304 = vld [vmem:[#allocation5 + $0x34] sm:$0xf]
        %v305 = vld [vmem:[#allocation5 + $0x38] sm:$0xf]
        %v306 = vld [vmem:[#allocation5 + $0x3c] sm:$0xf]
        %v307 = vld [vmem:[%s2] sm:$0x1]
        %v308 = vunpack.c.l.bf16 %v307
        %v309 = vlaneseq
        %v310 = vshrl.u32 %v309, 7
        %v311 = vsub.s32 0, %v310
        %v312 = vrot.slane %v308, %v311
        %v329 = vunpack.c.l.b16 %v275
        %v330 = vunpack.c.l.b16 %v276
        %v331 = vunpack.c.l.b16 %v277
        %v332 = vunpack.c.l.b16 %v278
        %v333 = vunpack.c.l.b16 %v279
        %v334 = vunpack.c.l.b16 %v280
        %v335 = vunpack.c.l.b16 %v281
        %v336 = vunpack.c.l.b16 %v282
        %v337 = vunpack.c.l.b16 %v283
        %v338 = vunpack.c.l.b16 %v284
        %v339 = vunpack.c.l.b16 %v285
        %v340 = vunpack.c.l.b16 %v286
        %v341 = vunpack.c.l.b16 %v287
        %v342 = vunpack.c.l.b16 %v288
        %v343 = vunpack.c.l.b16 %v289
        %v344 = vunpack.c.l.b16 %v290
        %v345 = vpack.c.b16 %v330, %v329
        %v346 = vpack.c.b16 %v332, %v331
        %v347 = vpack.c.b16 %v334, %v333
        %v348 = vpack.c.b16 %v336, %v335
        %v349 = vpack.c.b16 %v338, %v337
        %v350 = vpack.c.b16 %v340, %v339
        %v351 = vpack.c.b16 %v342, %v341
        %v352 = vpack.c.b16 %v344, %v343
        %v377 = vunpack.c.l.b16 %v291
        %v378 = vunpack.c.l.b16 %v292
        %v379 = vunpack.c.l.b16 %v293
        %v380 = vunpack.c.l.b16 %v294
        %v381 = vunpack.c.l.b16 %v295
        %v382 = vunpack.c.l.b16 %v296
        %v383 = vunpack.c.l.b16 %v297
        %v384 = vunpack.c.l.b16 %v298
        %v385 = vunpack.c.l.b16 %v299
        %v386 = vunpack.c.l.b16 %v300
        %v387 = vunpack.c.l.b16 %v301
        %v388 = vunpack.c.l.b16 %v302
        %v389 = vunpack.c.l.b16 %v303
        %v390 = vunpack.c.l.b16 %v304
        %v391 = vunpack.c.l.b16 %v305
        %v392 = vunpack.c.l.b16 %v306
        %v393 = vpack.c.b16 %v378, %v377
        %v394 = vpack.c.b16 %v380, %v379
        %v395 = vpack.c.b16 %v382, %v381
        %v396 = vpack.c.b16 %v384, %v383
        %v397 = vpack.c.b16 %v386, %v385
        %v398 = vpack.c.b16 %v388, %v387
        %v399 = vpack.c.b16 %v390, %v389
        %v400 = vpack.c.b16 %v392, %v391
        %409 = vmatprep.subr.bf16.mxu0 0
        %410 = vmatpush1.bf16.msra.mxu0 %v393
        %411 = vmatprep.subr.bf16.mxu0 0
        %412 = vmatpush1.bf16.msra.mxu0 %v394
        %413 = vmatprep.subr.bf16.mxu0 0
        %414 = vmatpush1.bf16.msra.mxu0 %v395
        %415 = vmatprep.subr.bf16.mxu0 0
        %416 = vmatpush1.bf16.msra.mxu0 %v396
        %417 = vmatprep.subr.bf16.mxu0 0
        %418 = vmatpush1.bf16.msra.mxu0 %v397
        %419 = vmatprep.subr.bf16.mxu0 0
        %420 = vmatpush1.bf16.msra.mxu0 %v398
        %421 = vmatprep.subr.bf16.mxu0 0
        %422 = vmatpush1.bf16.msra.mxu0 %v399
        %423 = vmatprep.subr.bf16.mxu0 0
        %424 = vmatpush1.bf16.msra.mxu0 %v400
        %425 = vmatprep.subr.bf16.mxu0 0
        %426 = vmatpush1.bf16.msra.mxu0 0
        %427 = vmatprep.subr.bf16.mxu0 0
        %428 = vmatpush1.bf16.msra.mxu0 0
        %429 = vmatprep.subr.bf16.mxu0 0
        %430 = vmatpush1.bf16.msra.mxu0 0
        %431 = vmatprep.subr.bf16.mxu0 0
        %432 = vmatpush1.bf16.msra.mxu0 0
        %433 = vmatprep.subr.bf16.mxu0 0
        %434 = vmatpush1.bf16.msra.mxu0 0
        %435 = vmatprep.subr.bf16.mxu0 0
        %436 = vmatpush1.bf16.msra.mxu0 0
        %437 = vmatprep.subr.bf16.mxu0 0
        %438 = vmatpush1.bf16.msra.mxu0 0
        %439 = vmatprep.subr.bf16.mxu0 0
        %440 = vmatpush1.bf16.msra.mxu0 0
        %441 = vmatprep.mubr.bf16.mxu0 0
        %442 = vmatmul.mubr.bf16.gmra.mrb[0].mxu0 %v345
        %v443 = vpop.f32.mrb[0].mxu0
        %v444 = vadd.f32 %v312, %v443
        %v445 = vpop.f32.mrb[0].mxu0
        %v446 = vpop.f32.mrb[0].mxu0
        %v447 = vadd.f32 %v312, %v446
        %v448 = vpop.f32.mrb[0].mxu0
        %449 = vmatprep.mubr.bf16.mxu0 0
        %450 = vmatmul.mubr.bf16.gmra.mrb[0].mxu0 %v346
        %v451 = vpop.f32.mrb[0].mxu0
        %v452 = vadd.f32 %v312, %v451
        %v453 = vpop.f32.mrb[0].mxu0
        %v454 = vpop.f32.mrb[0].mxu0
        %v455 = vadd.f32 %v312, %v454
        %v456 = vpop.f32.mrb[0].mxu0
        %457 = vmatprep.mubr.bf16.mxu0 0
        %458 = vmatmul.mubr.bf16.gmra.mrb[0].mxu0 %v347
        %v459 = vpop.f32.mrb[0].mxu0
        %v460 = vadd.f32 %v312, %v459
        %v461 = vpop.f32.mrb[0].mxu0
        %v462 = vpop.f32.mrb[0].mxu0
        %v463 = vadd.f32 %v312, %v462
        %v464 = vpop.f32.mrb[0].mxu0
        %465 = vmatprep.mubr.bf16.mxu0 0
        %466 = vmatmul.mubr.bf16.gmra.mrb[0].mxu0 %v348
        %v467 = vpop.f32.mrb[0].mxu0
        %v468 = vadd.f32 %v312, %v467
        %v469 = vpop.f32.mrb[0].mxu0
        %v470 = vpop.f32.mrb[0].mxu0
        %v471 = vadd.f32 %v312, %v470
        %v472 = vpop.f32.mrb[0].mxu0
        %473 = vmatprep.mubr.bf16.mxu0 0
        %474 = vmatmul.mubr.bf16.gmra.mrb[0].mxu0 %v349
        %v475 = vpop.f32.mrb[0].mxu0
        %v476 = vadd.f32 %v312, %v475
        %v477 = vpop.f32.mrb[0].mxu0
        %v478 = vpop.f32.mrb[0].mxu0
        %v479 = vadd.f32 %v312, %v478
        %v480 = vpop.f32.mrb[0].mxu0
        %481 = vmatprep.mubr.bf16.mxu0 0
        %482 = vmatmul.mubr.bf16.gmra.mrb[0].mxu0 %v350
        %v483 = vpop.f32.mrb[0].mxu0
        %v484 = vadd.f32 %v312, %v483
        %v485 = vpop.f32.mrb[0].mxu0
        %v486 = vpop.f32.mrb[0].mxu0
        %v487 = vadd.f32 %v312, %v486
        %v488 = vpop.f32.mrb[0].mxu0
        %489 = vmatprep.mubr.bf16.mxu0 0
        %490 = vmatmul.mubr.bf16.gmra.mrb[0].mxu0 %v351
        %v491 = vpop.f32.mrb[0].mxu0
        %v492 = vadd.f32 %v312, %v491
        %v493 = vpop.f32.mrb[0].mxu0
        %v494 = vpop.f32.mrb[0].mxu0
        %v495 = vadd.f32 %v312, %v494
        %v496 = vpop.f32.mrb[0].mxu0
        %497 = vmatprep.mubr.bf16.mxu0 0
        %498 = vmatmul.mubr.bf16.gmra.mrb[0].mxu0 %v352
        %v499 = vpop.f32.mrb[0].mxu0
        %v500 = vadd.f32 %v312, %v499
        %v501 = vpop.f32.mrb[0].mxu0
        %v502 = vpop.f32.mrb[0].mxu0
        %v503 = vadd.f32 %v312, %v502
        %v504 = vpop.f32.mrb[0].mxu0
        %505 = vdwg.mxu0
        %v506 = vmul.f32 %v444, 0.5
        %v507 = vmul.f32 %v447, 0.5
        %v508 = vmul.f32 %v452, 0.5
        %v509 = vmul.f32 %v455, 0.5
        %v510 = vmul.f32 %v460, 0.5
        %v511 = vmul.f32 %v463, 0.5
        %v512 = vmul.f32 %v468, 0.5
        %v513 = vmul.f32 %v471, 0.5
        %v514 = vmul.f32 %v476, 0.5
        %v515 = vmul.f32 %v479, 0.5
        %v516 = vmul.f32 %v484, 0.5
        %v517 = vmul.f32 %v487, 0.5
        %v518 = vmul.f32 %v492, 0.5
        %v519 = vmul.f32 %v495, 0.5
        %v520 = vmul.f32 %v500, 0.5
        %v521 = vmul.f32 %v503, 0.5
        %v522 = vmul.f32 %v444, 0.70710677
        %v523 = vmul.f32 %v447, 0.70710677
        %v524 = vmul.f32 %v452, 0.70710677
        %v525 = vmul.f32 %v455, 0.70710677
        %v526 = vmul.f32 %v460, 0.70710677
        %v527 = vmul.f32 %v463, 0.70710677
        %v528 = vmul.f32 %v468, 0.70710677
        %v529 = vmul.f32 %v471, 0.70710677
        %v530 = vmul.f32 %v476, 0.70710677
        %v531 = vmul.f32 %v479, 0.70710677
        %v532 = vmul.f32 %v484, 0.70710677
        %v533 = vmul.f32 %v487, 0.70710677
        %v534 = vmul.f32 %v492, 0.70710677
        %v535 = vmul.f32 %v495, 0.70710677
        %v536 = vmul.f32 %v500, 0.70710677
        %v537 = vmul.f32 %v503, 0.70710677
        %v538 = verf.f32.pop %v522
        %v539 = verf.f32.pop %v523
        %v540 = verf.f32.pop %v524
        %v541 = verf.f32.pop %v525
        %v542 = verf.f32.pop %v526
        %v543 = verf.f32.pop %v527
        %v544 = verf.f32.pop %v528
        %v545 = verf.f32.pop %v529
        %v546 = verf.f32.pop %v530
        %v547 = verf.f32.pop %v531
        %v548 = verf.f32.pop %v532
        %v549 = verf.f32.pop %v533
        %v550 = verf.f32.pop %v534
        %v551 = verf.f32.pop %v535
        %v552 = verf.f32.pop %v536
        %v553 = verf.f32.pop %v537
        %v554 = vadd.f32 %v538, 1.0
        %v555 = vadd.f32 %v539, 1.0
        %v556 = vadd.f32 %v540, 1.0
        %v557 = vadd.f32 %v541, 1.0
        %v558 = vadd.f32 %v542, 1.0
        %v559 = vadd.f32 %v543, 1.0
        %v560 = vadd.f32 %v544, 1.0
        %v561 = vadd.f32 %v545, 1.0
        %v562 = vadd.f32 %v546, 1.0
        %v563 = vadd.f32 %v547, 1.0
        %v564 = vadd.f32 %v548, 1.0
        %v565 = vadd.f32 %v549, 1.0
        %v566 = vadd.f32 %v550, 1.0
        %v567 = vadd.f32 %v551, 1.0
        %v568 = vadd.f32 %v552, 1.0
        %v569 = vadd.f32 %v553, 1.0
        %v570 = vmul.f32 %v506, %v554
        %v571 = vmul.f32 %v507, %v555
        %v572 = vmul.f32 %v508, %v556
        %v573 = vmul.f32 %v509, %v557
        %v574 = vmul.f32 %v510, %v558
        %v575 = vmul.f32 %v511, %v559
        %v576 = vmul.f32 %v512, %v560
        %v577 = vmul.f32 %v513, %v561
        %v578 = vmul.f32 %v514, %v562
        %v579 = vmul.f32 %v515, %v563
        %v580 = vmul.f32 %v516, %v564
        %v581 = vmul.f32 %v517, %v565
        %v582 = vmul.f32 %v518, %v566
        %v583 = vmul.f32 %v519, %v567
        %v584 = vmul.f32 %v520, %v568
        %v585 = vmul.f32 %v521, %v569
        %v586 = vpack.c.bf16 %v571, %v570
        %v587 = vpack.c.bf16 %v573, %v572
        %v588 = vpack.c.bf16 %v575, %v574
        %v589 = vpack.c.bf16 %v577, %v576
        %v590 = vpack.c.bf16 %v579, %v578
        %v591 = vpack.c.bf16 %v581, %v580
        %v592 = vpack.c.bf16 %v583, %v582
        %v593 = vpack.c.bf16 %v585, %v584
        %v594 = vld [vmem:[#allocation7] sm:$0xf]
        %v595 = vld [vmem:[#allocation7 + $0x4] sm:$0xf]
        %v596 = vld [vmem:[#allocation7 + $0x8] sm:$0xf]
        %v597 = vld [vmem:[#allocation7 + $0xc] sm:$0xf]
        %v598 = vld [vmem:[#allocation7 + $0x10] sm:$0xf]
        %v599 = vld [vmem:[#allocation7 + $0x14] sm:$0xf]
        %v600 = vld [vmem:[#allocation7 + $0x18] sm:$0xf]
        %v601 = vld [vmem:[#allocation7 + $0x1c] sm:$0xf]
        %v602 = vld [vmem:[#allocation7 + $0x20] sm:$0xf]
        %v603 = vld [vmem:[#allocation7 + $0x24] sm:$0xf]
        %v604 = vld [vmem:[#allocation7 + $0x28] sm:$0xf]
        %v605 = vld [vmem:[#allocation7 + $0x2c] sm:$0xf]
        %v606 = vld [vmem:[#allocation7 + $0x30] sm:$0xf]
        %v607 = vld [vmem:[#allocation7 + $0x34] sm:$0xf]
        %v608 = vld [vmem:[#allocation7 + $0x38] sm:$0xf]
        %v609 = vld [vmem:[#allocation7 + $0x3c] sm:$0xf]
        %v610 = vld [vmem:[%s4] sm:$0x1]
        %v611 = vunpack.c.l.bf16 %v610
        %v612 = vlaneseq
        %v613 = vshrl.u32 %v612, 7
        %v614 = vsub.s32 0, %v613
        %v615 = vrot.slane %v611, %v614
        %v632 = vunpack.c.l.b16 %v594
        %v633 = vunpack.c.l.b16 %v595
        %v634 = vunpack.c.l.b16 %v596
        %v635 = vunpack.c.l.b16 %v597
        %v636 = vunpack.c.l.b16 %v598
        %v637 = vunpack.c.l.b16 %v599
        %v638 = vunpack.c.l.b16 %v600
        %v639 = vunpack.c.l.b16 %v601
        %v640 = vunpack.c.l.b16 %v602
        %v641 = vunpack.c.l.b16 %v603
        %v642 = vunpack.c.l.b16 %v604
        %v643 = vunpack.c.l.b16 %v605
        %v644 = vunpack.c.l.b16 %v606
        %v645 = vunpack.c.l.b16 %v607
        %v646 = vunpack.c.l.b16 %v608
        %v647 = vunpack.c.l.b16 %v609
        %v648 = vpack.c.b16 %v633, %v632
        %v649 = vpack.c.b16 %v635, %v634
        %v650 = vpack.c.b16 %v637, %v636
        %v651 = vpack.c.b16 %v639, %v638
        %v652 = vpack.c.b16 %v641, %v640
        %v653 = vpack.c.b16 %v643, %v642
        %v654 = vpack.c.b16 %v645, %v644
        %v655 = vpack.c.b16 %v647, %v646
        %664 = vmatprep.subr.bf16.mxu0 0
        %665 = vmatpush1.bf16.msra.mxu0 %v648
        %666 = vmatprep.subr.bf16.mxu0 0
        %667 = vmatpush1.bf16.msra.mxu0 %v649
        %668 = vmatprep.subr.bf16.mxu0 0
        %669 = vmatpush1.bf16.msra.mxu0 %v650
        %670 = vmatprep.subr.bf16.mxu0 0
        %671 = vmatpush1.bf16.msra.mxu0 %v651
        %672 = vmatprep.subr.bf16.mxu0 0
        %673 = vmatpush1.bf16.msra.mxu0 %v652
        %674 = vmatprep.subr.bf16.mxu0 0
        %675 = vmatpush1.bf16.msra.mxu0 %v653
        %676 = vmatprep.subr.bf16.mxu0 0
        %677 = vmatpush1.bf16.msra.mxu0 %v654
        %678 = vmatprep.subr.bf16.mxu0 0
        %679 = vmatpush1.bf16.msra.mxu0 %v655
        %680 = vmatprep.subr.bf16.mxu0 0
        %681 = vmatpush1.bf16.msra.mxu0 0
        %682 = vmatprep.subr.bf16.mxu0 0
        %683 = vmatpush1.bf16.msra.mxu0 0
        %684 = vmatprep.subr.bf16.mxu0 0
        %685 = vmatpush1.bf16.msra.mxu0 0
        %686 = vmatprep.subr.bf16.mxu0 0
        %687 = vmatpush1.bf16.msra.mxu0 0
        %688 = vmatprep.subr.bf16.mxu0 0
        %689 = vmatpush1.bf16.msra.mxu0 0
        %690 = vmatprep.subr.bf16.mxu0 0
        %691 = vmatpush1.bf16.msra.mxu0 0
        %692 = vmatprep.subr.bf16.mxu0 0
        %693 = vmatpush1.bf16.msra.mxu0 0
        %694 = vmatprep.subr.bf16.mxu0 0
        %695 = vmatpush1.bf16.msra.mxu0 0
        %696 = vmatprep.mubr.bf16.mxu0 0
        %697 = vmatmul.mubr.bf16.gmra.mrb[0].mxu0 %v586
        %v698 = vpop.f32.mrb[0].mxu0
        %v699 = vadd.f32 %v615, %v698
        %v700 = vpop.f32.mrb[0].mxu0
        %v701 = vpop.f32.mrb[0].mxu0
        %v702 = vadd.f32 %v615, %v701
        %v703 = vpop.f32.mrb[0].mxu0
        %704 = vmatprep.mubr.bf16.mxu0 0
        %705 = vmatmul.mubr.bf16.gmra.mrb[0].mxu0 %v587
        %v706 = vpop.f32.mrb[0].mxu0
        %v707 = vadd.f32 %v615, %v706
        %v708 = vpop.f32.mrb[0].mxu0
        %v709 = vpop.f32.mrb[0].mxu0
        %v710 = vadd.f32 %v615, %v709
        %v711 = vpop.f32.mrb[0].mxu0
        %712 = vmatprep.mubr.bf16.mxu0 0
        %713 = vmatmul.mubr.bf16.gmra.mrb[0].mxu0 %v588
        %v714 = vpop.f32.mrb[0].mxu0
        %v715 = vadd.f32 %v615, %v714
        %v716 = vpop.f32.mrb[0].mxu0
        %v717 = vpop.f32.mrb[0].mxu0
        %v718 = vadd.f32 %v615, %v717
        %v719 = vpop.f32.mrb[0].mxu0
        %720 = vmatprep.mubr.bf16.mxu0 0
        %721 = vmatmul.mubr.bf16.gmra.mrb[0].mxu0 %v589
        %v722 = vpop.f32.mrb[0].mxu0
        %v723 = vadd.f32 %v615, %v722
        %v724 = vpop.f32.mrb[0].mxu0
        %v725 = vpop.f32.mrb[0].mxu0
        %v726 = vadd.f32 %v615, %v725
        %v727 = vpop.f32.mrb[0].mxu0
        %728 = vmatprep.mubr.bf16.mxu0 0
        %729 = vmatmul.mubr.bf16.gmra.mrb[0].mxu0 %v590
        %v730 = vpop.f32.mrb[0].mxu0
        %v731 = vadd.f32 %v615, %v730
        %v732 = vpop.f32.mrb[0].mxu0
        %v733 = vpop.f32.mrb[0].mxu0
        %v734 = vadd.f32 %v615, %v733
        %v735 = vpop.f32.mrb[0].mxu0
        %736 = vmatprep.mubr.bf16.mxu0 0
        %737 = vmatmul.mubr.bf16.gmra.mrb[0].mxu0 %v591
        %v738 = vpop.f32.mrb[0].mxu0
        %v739 = vadd.f32 %v615, %v738
        %v740 = vpop.f32.mrb[0].mxu0
        %v741 = vpop.f32.mrb[0].mxu0
        %v742 = vadd.f32 %v615, %v741
        %v743 = vpop.f32.mrb[0].mxu0
        %744 = vmatprep.mubr.bf16.mxu0 0
        %745 = vmatmul.mubr.bf16.gmra.mrb[0].mxu0 %v592
        %v746 = vpop.f32.mrb[0].mxu0
        %v747 = vadd.f32 %v615, %v746
        %v748 = vpop.f32.mrb[0].mxu0
        %v749 = vpop.f32.mrb[0].mxu0
        %v750 = vadd.f32 %v615, %v749
        %v751 = vpop.f32.mrb[0].mxu0
        %752 = vmatprep.mubr.bf16.mxu0 0
        %753 = vmatmul.mubr.bf16.gmra.mrb[0].mxu0 %v593
        %v754 = vpop.f32.mrb[0].mxu0
        %v755 = vadd.f32 %v615, %v754
        %v756 = vpop.f32.mrb[0].mxu0
        %v757 = vpop.f32.mrb[0].mxu0
        %v758 = vadd.f32 %v615, %v757
        %v759 = vpop.f32.mrb[0].mxu0
        %760 = vdwg.mxu0
        %v761 = vmul.f32 %v699, 0.5
        %v762 = vmul.f32 %v702, 0.5
        %v763 = vmul.f32 %v707, 0.5
        %v764 = vmul.f32 %v710, 0.5
        %v765 = vmul.f32 %v715, 0.5
        %v766 = vmul.f32 %v718, 0.5
        %v767 = vmul.f32 %v723, 0.5
        %v768 = vmul.f32 %v726, 0.5
        %v769 = vmul.f32 %v731, 0.5
        %v770 = vmul.f32 %v734, 0.5
        %v771 = vmul.f32 %v739, 0.5
        %v772 = vmul.f32 %v742, 0.5
        %v773 = vmul.f32 %v747, 0.5
        %v774 = vmul.f32 %v750, 0.5
        %v775 = vmul.f32 %v755, 0.5
        %v776 = vmul.f32 %v758, 0.5
        %v777 = vmul.f32 %v699, 0.70710677
        %v778 = vmul.f32 %v702, 0.70710677
        %v779 = vmul.f32 %v707, 0.70710677
        %v780 = vmul.f32 %v710, 0.70710677
        %v781 = vmul.f32 %v715, 0.70710677
        %v782 = vmul.f32 %v718, 0.70710677
        %v783 = vmul.f32 %v723, 0.70710677
        %v784 = vmul.f32 %v726, 0.70710677
        %v785 = vmul.f32 %v731, 0.70710677
        %v786 = vmul.f32 %v734, 0.70710677
        %v787 = vmul.f32 %v739, 0.70710677
        %v788 = vmul.f32 %v742, 0.70710677
        %v789 = vmul.f32 %v747, 0.70710677
        %v790 = vmul.f32 %v750, 0.70710677
        %v791 = vmul.f32 %v755, 0.70710677
        %v792 = vmul.f32 %v758, 0.70710677
        %v793 = verf.f32.pop %v777
        %v794 = verf.f32.pop %v778
        %v795 = verf.f32.pop %v779
        %v796 = verf.f32.pop %v780
        %v797 = verf.f32.pop %v781
        %v798 = verf.f32.pop %v782
        %v799 = verf.f32.pop %v783
        %v800 = verf.f32.pop %v784
        %v801 = verf.f32.pop %v785
        %v802 = verf.f32.pop %v786
        %v803 = verf.f32.pop %v787
        %v804 = verf.f32.pop %v788
        %v805 = verf.f32.pop %v789
        %v806 = verf.f32.pop %v790
        %v807 = verf.f32.pop %v791
        %v808 = verf.f32.pop %v792
        %v809 = vadd.f32 %v793, 1.0
        %v810 = vadd.f32 %v794, 1.0
        %v811 = vadd.f32 %v795, 1.0
        %v812 = vadd.f32 %v796, 1.0
        %v813 = vadd.f32 %v797, 1.0
        %v814 = vadd.f32 %v798, 1.0
        %v815 = vadd.f32 %v799, 1.0
        %v816 = vadd.f32 %v800, 1.0
        %v817 = vadd.f32 %v801, 1.0
        %v818 = vadd.f32 %v802, 1.0
        %v819 = vadd.f32 %v803, 1.0
        %v820 = vadd.f32 %v804, 1.0
        %v821 = vadd.f32 %v805, 1.0
        %v822 = vadd.f32 %v806, 1.0
        %v823 = vadd.f32 %v807, 1.0
        %v824 = vadd.f32 %v808, 1.0
        %v825 = vmul.f32 %v761, %v809
        %v826 = vmul.f32 %v762, %v810
        %v827 = vmul.f32 %v763, %v811
        %v828 = vmul.f32 %v764, %v812
        %v829 = vmul.f32 %v765, %v813
        %v830 = vmul.f32 %v766, %v814
        %v831 = vmul.f32 %v767, %v815
        %v832 = vmul.f32 %v768, %v816
        %v833 = vmul.f32 %v769, %v817
        %v834 = vmul.f32 %v770, %v818
        %v835 = vmul.f32 %v771, %v819
        %v836 = vmul.f32 %v772, %v820
        %v837 = vmul.f32 %v773, %v821
        %v838 = vmul.f32 %v774, %v822
        %v839 = vmul.f32 %v775, %v823
        %v840 = vmul.f32 %v776, %v824
        %v841 = vpack.c.bf16 %v826, %v825
        %v842 = vpack.c.bf16 %v828, %v827
        %v843 = vpack.c.bf16 %v830, %v829
        %v844 = vpack.c.bf16 %v832, %v831
        %v845 = vpack.c.bf16 %v834, %v833
        %v846 = vpack.c.bf16 %v836, %v835
        %v847 = vpack.c.bf16 %v838, %v837
        %v848 = vpack.c.bf16 %v840, %v839
        %v857 = vunpack.c.l.b16 %v841
        %v858 = vunpack.c.h.b16 %v841
        %v859 = vunpack.c.l.b16 %v842
        %v860 = vunpack.c.h.b16 %v842
        %v861 = vunpack.c.l.b16 %v843
        %v862 = vunpack.c.h.b16 %v843
        %v863 = vunpack.c.l.b16 %v844
        %v864 = vunpack.c.h.b16 %v844
        %v865 = vunpack.c.l.b16 %v845
        %v866 = vunpack.c.h.b16 %v845
        %v867 = vunpack.c.l.b16 %v846
        %v868 = vunpack.c.h.b16 %v846
        %v869 = vunpack.c.l.b16 %v847
        %v870 = vunpack.c.h.b16 %v847
        %v871 = vunpack.c.l.b16 %v848
        %v872 = vunpack.c.h.b16 %v848
        %v873 = vpack.c.b16 %v857, %v857
        %v874 = vpack.c.b16 %v858, %v858
        %v875 = vpack.c.b16 %v859, %v859
        %v876 = vpack.c.b16 %v860, %v860
        %v877 = vpack.c.b16 %v861, %v861
        %v878 = vpack.c.b16 %v862, %v862
        %v879 = vpack.c.b16 %v863, %v863
        %v880 = vpack.c.b16 %v864, %v864
        %v881 = vpack.c.b16 %v865, %v865
        %v882 = vpack.c.b16 %v866, %v866
        %v883 = vpack.c.b16 %v867, %v867
        %v884 = vpack.c.b16 %v868, %v868
        %v885 = vpack.c.b16 %v869, %v869
        %v886 = vpack.c.b16 %v870, %v870
        %v887 = vpack.c.b16 %v871, %v871
        %v888 = vpack.c.b16 %v872, %v872
        %905 = vst [vmem:[%s271] sm:$0xf] %v873
        %906 = vst [vmem:[%s271 + $0x4] sm:$0xf] %v874
        %907 = vst [vmem:[%s271 + $0x8] sm:$0xf] %v875
        %908 = vst [vmem:[%s271 + $0xc] sm:$0xf] %v876
        %909 = vst [vmem:[%s271 + $0x10] sm:$0xf] %v877
        %910 = vst [vmem:[%s271 + $0x14] sm:$0xf] %v878
        %911 = vst [vmem:[%s271 + $0x18] sm:$0xf] %v879
        %912 = vst [vmem:[%s271 + $0x1c] sm:$0xf] %v880
        %913 = vst [vmem:[%s271 + $0x20] sm:$0xf] %v881
        %914 = vst [vmem:[%s271 + $0x24] sm:$0xf] %v882
        %915 = vst [vmem:[%s271 + $0x28] sm:$0xf] %v883
        %916 = vst [vmem:[%s271 + $0x2c] sm:$0xf] %v884
        %917 = vst [vmem:[%s271 + $0x30] sm:$0xf] %v885
        %918 = vst [vmem:[%s271 + $0x34] sm:$0xf] %v886
        %919 = vst [vmem:[%s271 + $0x38] sm:$0xf] %v887
        %920 = vst [vmem:[%s271 + $0x3c] sm:$0xf] %v888
        %s921 = sand.u32 %s141, 1
        %s922 = scalar_lea.sflag [#allocation4], %s921
        %s923 = sand.u32 %s141, 1
        %s924 = smul.addr %s923, 64
        %s925 = scalar_lea.vmem [#allocation8], %s924
        // Predicated region
        $region53: #{tpu_custom_call.1} parent=39 // pred_check
          %p926 = pneg %p151
        $region54: #{tpu_custom_call.1} parent=39 // pred_check_branch
          %928 = sbr.rel (%p926) target = $region56
        $region55: #{tpu_custom_call.1} parent=39 // pred_region
          %s929 = smul.u32 16, %s23
          %s931 = ssub.s32 1024, 1024
          %932 = vsyncadd %s922, %s931
          %s933 = smul.addr %s929, 64
          %s934 = scalar_lea.hbm %s5, %s933
          %s935 = sshll.u32 %s925, 4
          %s936 = int_to_ptr.vmem [resolvable:$true] %s935
          %941 = dma.vmem_to_hbm [thread:$0]  %s936, 1024, %s934, %s922, 64, 64, 4
        $region56: #{tpu_custom_call.1} parent=39 // pred_fallthru
          _
      $region40: #{tpu_custom_call.1} parent=5 // pred_fallthru
        _
      %p942 = scmp.le.s32.totalorder 2, %s18
      // Predicated region
      $region57: #{tpu_custom_call.1} parent=5 // pred_check
        %p943 = pneg %p942
      $region58: #{tpu_custom_call.1} parent=5 // pred_check_branch
        %945 = sbr.rel (%p943) target = $region60
      $region59: #{tpu_custom_call.1} parent=5 // pred_region
        %s946 = ssub.s32 %s18, 2
        // Predicated region
        $region61: #{tpu_custom_call.1} parent=59 // pred_check
          %p947 = pneg %p157
        $region62: #{tpu_custom_call.1} parent=59 // pred_check_branch
          %949 = sbr.rel (%p947) target = $region64
        $region63: #{tpu_custom_call.1} parent=59 // pred_region
          %s950 = sand.u32 %s142, 1
          %s951 = scalar_lea.sflag [#allocation4], %s950
          %s952 = sand.u32 %s142, 1
          %s953 = smul.addr %s952, 64
          %s954 = scalar_lea.vmem [#allocation8], %s953
          %955 = dma.done %s951, 1024
        $region64: #{tpu_custom_call.1} parent=59 // pred_fallthru
          _
      $region60: #{tpu_custom_call.1} parent=5 // pred_fallthru
        _
    $region6: #{tpu_custom_call.1} parent=1 // loop_footer
      %s22 = sadd.s32 1, %s18
    $region7: #{tpu_custom_call.1} parent=1 // loop_footer_branch
      %17 = sbr.rel target = $region3
    $region8: #{tpu_custom_call.1} parent=1 // loop_exit
      _
    %956 = vsyncpa [#allocation3], 1
    %s957 = scalar_lea.sflag [#allocation3], 1
    %958 = vsyncpa %s957, 1
    %959 = vsyncpa [#allocation6], 1
    %960 = vsyncpa [#allocation4], 1
    %s961 = scalar_lea.sflag [#allocation4], 1
    %962 = vsyncpa %s961, 1

</llo_original>
